<compile_context>
chip_gen: v7x
topology: tpu7x:2x2x1
jax: 0.10.0
libtpu: 0.0.40
codegen_flags: <defaults>
</compile_context>

<pallas_src>
import jax
import jax.numpy as jnp
from jax import lax
from jax.experimental import pallas as pl
from jax.experimental.pallas import tpu as pltpu

BN_EPS = 1e-5

D_IN, D_H1, D_Z, D_AUX = 88, 70, 54, 2
D_3A = D_H1 + D_AUX                      # merged dense3 + aux RHS width (72)

# Packed output slab: no field straddles a 128-lane vreg boundary.
OFF_XO, OFF_AUX, OFF_Z = 0, 88, 128
OUT_PAD = 256                            # lane-dense output width

N_SWEEPS = 4                             # tiled path: stats1, stats2, stats3, apply


# --------------------------------------------------------------------------- #
# Kernels
# --------------------------------------------------------------------------- #
def _unpack_pvec(pvec_ref):
    g1, be1 = pvec_ref[0:1, 0:D_H1], pvec_ref[1:2, 0:D_H1]
    g2, be2 = pvec_ref[2:3, 0:D_Z], pvec_ref[3:4, 0:D_Z]
    g3, be3 = pvec_ref[4:5, 0:D_H1], pvec_ref[5:6, 0:D_H1]
    bp = pvec_ref[6:7, 0:D_IN]
    ba = pvec_ref[7:8, 0:D_AUX]
    return g1, be1, g2, be2, g3, be3, bp, ba


def mtae_resident_kernel(x_ref, w1_ref, w2_ref, w3a_ref, wp_ref, pvec_ref, out_ref):
    """Whole batch resident in VMEM; one fused invocation."""
    x = x_ref[...]                        # (B, 88) compute dtype (bf16)
    cd = x.dtype
    g1, be1, g2, be2, g3, be3, bp, ba = _unpack_pvec(pvec_ref)

    def bn_relu(h, gamma, beta, out_dtype):
        # Training-mode BatchNorm1d fused to one scale/shift (f32 math).
        mu = jnp.mean(h, axis=0, keepdims=True)
        var = jnp.maximum(jnp.mean(h * h, axis=0, keepdims=True) - mu * mu, 0.0)
        s = gamma * lax.rsqrt(var + BN_EPS)
        t = beta - mu * s
        return jnp.maximum(h * s + t, 0.0).astype(out_dtype)

    # Pre-BN linear biases are omitted: exactly cancelled by the BN mean sub.
    h1 = bn_relu(jnp.dot(x, w1_ref[...], preferred_element_type=jnp.float32),
                 g1, be1, cd)                                          # (B,70) bf16
    z = bn_relu(jnp.dot(h1, w2_ref[...], preferred_element_type=jnp.float32),
                g2, be2, jnp.float32)                                  # (B,54) f32
    zc = z.astype(cd)
    hz = jnp.dot(zc, w3a_ref[...], preferred_element_type=jnp.float32)  # (B,72)
    h3 = bn_relu(hz[:, 0:D_H1], g3, be3, cd)                           # (B,70) bf16
    xo = jnp.dot(h3, wp_ref[...], preferred_element_type=jnp.float32) + bp
    aux = hz[:, D_H1:D_3A] + ba
    m = jnp.max(aux, axis=1, keepdims=True)
    e = jnp.exp(aux - m)
    probs = e / jnp.sum(e, axis=1, keepdims=True)     # exact recip, (B,1) is tiny

    out_ref[:, OFF_XO:OFF_XO + D_IN] = xo
    out_ref[:, OFF_AUX:OFF_AUX + D_AUX] = probs
    out_ref[:, OFF_Z:OFF_Z + D_Z] = z
    # Pad lanes intentionally left unwritten (wrapper never reads them).


def _make_tiled_kernel(total_batch):
    """Batch gridded into tiles; 4-sweep recompute with cross-tile BN stats."""
    inv_b = 1.0 / float(total_batch)

    def kernel(x_ref, w1_ref, w2_ref, w3a_ref, wp_ref, pvec_ref,
               out_ref, stats_ref, st_ref):
        p = pl.program_id(0)              # sweep
        i = pl.program_id(1)              # batch tile
        nt = pl.num_programs(1)

        x = x_ref[...]                    # (TB, 88) bf16
        cd = x.dtype
        g1, be1, g2, be2, g3, be3, bp, ba = _unpack_pvec(pvec_ref)

        def accum(row, h, width):
            @pl.when(i == 0)
            def _():
                stats_ref[row:row + 2, :] = jnp.zeros((2, 128), jnp.float32)
            stats_ref[row:row + 1, 0:width] += jnp.sum(h, axis=0, keepdims=True)
            stats_ref[row + 1:row + 2, 0:width] += jnp.sum(h * h, axis=0,
                                                           keepdims=True)

        def finalize(row, gamma, beta, width):
            @pl.when(i == nt - 1)
            def _():
                mu = stats_ref[row:row + 1, 0:width] * inv_b
                var = jnp.maximum(
                    stats_ref[row + 1:row + 2, 0:width] * inv_b - mu * mu, 0.0)
                s = gamma * lax.rsqrt(var + BN_EPS)
                st_ref[row:row + 1, 0:width] = s
                st_ref[row + 1:row + 2, 0:width] = beta - mu * s

        def apply_bn_relu(h, row, width, out_dtype):
            s = st_ref[row:row + 1, 0:width]
            t = st_ref[row + 1:row + 2, 0:width]
            return jnp.maximum(h * s + t, 0.0).astype(out_dtype)

        def l1_pre():
            return jnp.dot(x, w1_ref[...], preferred_element_type=jnp.float32)

        def l2_pre():
            h1 = apply_bn_relu(l1_pre(), 0, D_H1, cd)
            return jnp.dot(h1, w2_ref[...], preferred_element_type=jnp.float32)

        def l3a_pre_and_z():
            z = apply_bn_relu(l2_pre(), 2, D_Z, jnp.float32)
            hz = jnp.dot(z.astype(cd), w3a_ref[...],
                         preferred_element_type=jnp.float32)
            return hz, z

        @pl.when(p == 0)                  # sweep 0: layer-1 pre-act statistics
        def _():
            accum(0, l1_pre(), D_H1)
            finalize(0, g1, be1, D_H1)

        @pl.when(p == 1)                  # sweep 1: layer-2 pre-act statistics
        def _():
            accum(2, l2_pre(), D_Z)
            finalize(2, g2, be2, D_Z)

        @pl.when(p == 2)                  # sweep 2: layer-3 pre-act statistics
        def _():
            hz, _ = l3a_pre_and_z()
            accum(4, hz[:, 0:D_H1], D_H1)
            finalize(4, g3, be3, D_H1)

        @pl.when(p == 3)                  # sweep 3: apply all layers + outputs
        def _():
            hz, z = l3a_pre_and_z()
            h3 = apply_bn_relu(hz[:, 0:D_H1], 4, D_H1, cd)
            xo = jnp.dot(h3, wp_ref[...], preferred_element_type=jnp.float32) + bp
            aux = hz[:, D_H1:D_3A] + ba
            m = jnp.max(aux, axis=1, keepdims=True)
            e = jnp.exp(aux - m)
            probs = e / jnp.sum(e, axis=1, keepdims=True)
            out_ref[:, OFF_XO:OFF_XO + D_IN] = xo
            out_ref[:, OFF_AUX:OFF_AUX + D_AUX] = probs
            out_ref[:, OFF_Z:OFF_Z + D_Z] = z

    return kernel


# --------------------------------------------------------------------------- #
# Parameters
# --------------------------------------------------------------------------- #
def _linear_init(key, fan_in, fan_out):
    # PyTorch nn.Linear default init: U(-1/sqrt(fan_in), 1/sqrt(fan_in)).
    kw, kb = jax.random.split(key)
    bound = 1.0 / jnp.sqrt(jnp.float32(fan_in))
    w = jax.random.uniform(kw, (fan_in, fan_out), jnp.float32, -bound, bound)
    b = jax.random.uniform(kb, (1, fan_out), jnp.float32, -bound, bound)
    return w, b


def init_params(key):
    k1, k2, k3, kp, ka = jax.random.split(key, 5)
    p = {}
    p["w1"], p["b1"] = _linear_init(k1, D_IN, D_H1)
    p["g1"], p["be1"] = jnp.ones((1, D_H1), jnp.float32), jnp.zeros((1, D_H1), jnp.float32)
    p["w2"], p["b2"] = _linear_init(k2, D_H1, D_Z)
    p["g2"], p["be2"] = jnp.ones((1, D_Z), jnp.float32), jnp.zeros((1, D_Z), jnp.float32)
    p["w3"], p["b3"] = _linear_init(k3, D_Z, D_H1)
    p["g3"], p["be3"] = jnp.ones((1, D_H1), jnp.float32), jnp.zeros((1, D_H1), jnp.float32)
    p["wp"], p["bp"] = _linear_init(kp, D_H1, D_IN)
    p["wa"], p["ba"] = _linear_init(ka, D_Z, D_AUX)
    return p


def _pack_param_slab(params):
    """Pack all small per-feature vectors into one (8, 128) f32 slab (1 DMA)."""
    def row(v):
        v = jnp.asarray(v, jnp.float32).reshape(-1)
        return jnp.pad(v, (0, 128 - v.shape[0]))
    return jnp.stack([
        row(params["g1"]), row(params["be1"]),
        row(params["g2"]), row(params["be2"]),
        row(params["g3"]), row(params["be3"]),
        row(params["bp"]), row(params["ba"]),
    ], axis=0)


def prepare_params(params, compute_dtype=jnp.bfloat16):
    """One-time weight cast / packing. Cache the result; do NOT redo per call."""
    w3a = jnp.concatenate([params["w3"], params["wa"]], axis=1)   # (54, 72)
    return {
        "w1": params["w1"].astype(compute_dtype),
        "w2": params["w2"].astype(compute_dtype),
        "w3a": w3a.astype(compute_dtype),
        "wp": params["wp"].astype(compute_dtype),
        "pvec": _pack_param_slab(params),                         # (8, 128) f32
    }


# --------------------------------------------------------------------------- #
# Wrapper
# --------------------------------------------------------------------------- #
def _vmem_budget_bytes():
    """Per-generation scoped-VMEM budget: ~48 MiB on 64 MiB parts (v7x),
    ~100 MiB on 128 MiB parts (v5e/v6e). Leaves headroom for Mosaic scratch."""
    cap = 64 * 1024 * 1024
    try:
        info = pltpu.get_tpu_info()
        cap = int(getattr(info, "vmem_capacity_bytes", cap) or cap)
    except Exception:
        pass
    return min(cap - 16 * 1024 * 1024, int(cap * 0.80))


def _resident_vmem_bytes(batch, compute_dtype):
    """Conservative estimate of the resident path's live VMEM working set."""
    itm = jnp.dtype(compute_dtype).itemsize
    per_row = 128 * itm              # x tile (lane padded)
    per_row += OUT_PAD * 4           # packed f32 output slab
    per_row += 10 * 128 * 4          # live f32 intermediates / temporaries
    per_row += 3 * 128 * itm         # compute-dtype copies of h1 / z / h3
    fixed = 6 * 128 * 128 * itm + 8 * 128 * 4
    return batch * per_row + fixed


def _pick_batch_tile(batch, requested=None, target=512):
    if requested is not None:
        if batch % requested == 0 and requested % 8 == 0:
            return requested
        return None
    t = min(batch, target)
    t -= t % 8
    while t >= 8 and batch % t != 0:
        t -= 8
    return t if t >= 8 else None


def multi_task_autoencoder(x, prepared, *, batch_tile=None, force_tiled=False):
    """Forward pass. Returns (reconstruction (B,88), bottleneck z (B,54),
    softmax probabilities (B,2)), all float32."""
    B = x.shape[0]
    cd = prepared["w1"].dtype
    budget = _vmem_budget_bytes()

    # TODO(synk): upstream producer should emit x already in bf16 (lane padded);
    # this per-call cast is a separate XLA pass.
    x_cd = x.astype(cd)
    args = (x_cd, prepared["w1"], prepared["w2"], prepared["w3a"],
            prepared["wp"], prepared["pvec"])

    tile = None
    if force_tiled or _resident_vmem_bytes(B, cd) > budget:
        tile = _pick_batch_tile(B, batch_tile)

    if tile is None:
        # Whole batch resident: one fused invocation.
        vmem = pl.BlockSpec(memory_space=pltpu.MemorySpace.VMEM)
        out = pl.pallas_call(
            mtae_resident_kernel,
            out_shape=jax.ShapeDtypeStruct((B, OUT_PAD), jnp.float32),
            in_specs=[vmem] * len(args),
            out_specs=vmem,
            compiler_params=pltpu.CompilerParams(vmem_limit_bytes=int(budget)),
        )(*args)
    else:
        nt = B // tile
        const = lambda p, i: (0, 0)
        grid_spec = pltpu.PrefetchScalarGridSpec(
            num_scalar_prefetch=0,
            grid=(N_SWEEPS, nt),
            in_specs=[
                pl.BlockSpec((tile, D_IN), lambda p, i: (i, 0)),
                pl.BlockSpec((D_IN, D_H1), const),
                pl.BlockSpec((D_H1, D_Z), const),
                pl.BlockSpec((D_Z, D_3A), const),
                pl.BlockSpec((D_H1, D_IN), const),
                pl.BlockSpec((8, 128), const),
            ],
            out_specs=pl.BlockSpec(
                (tile, OUT_PAD),
                # Outputs are only written in the final sweep; park the earlier
                # sweeps on block 0 so no garbage block is ever written back.
                lambda p, i: (i * (p // (N_SWEEPS - 1)), 0)),
            scratch_shapes=[pltpu.VMEM((8, 128), jnp.float32),    # sum / sum-sq
                            pltpu.VMEM((8, 128), jnp.float32)],   # scale / shift
        )
        out = pl.pallas_call(
            _make_tiled_kernel(B),
            out_shape=jax.ShapeDtypeStruct((B, OUT_PAD), jnp.float32),
            grid_spec=grid_spec,
            compiler_params=pltpu.CompilerParams(
                # Cross-tile BN-stat accumulation + finalize-at-last-tile force
                # sequential order on both grid axes.
                # TODO(synk): v7x megacore - "parallel" tile axis with a
                # cross-core CMEM/VMEM_SHARED reduction of the BN statistics.
                dimension_semantics=("arbitrary", "arbitrary"),
                vmem_limit_bytes=int(budget)),
        )(*args)

    # NOTE: downstream consumers can read the packed slab at these offsets
    # directly to avoid materializing the three slice copies.
    xo = out[:, OFF_XO:OFF_XO + D_IN]
    z = out[:, OFF_Z:OFF_Z + D_Z]
    probs = out[:, OFF_AUX:OFF_AUX + D_AUX]
    return xo, z, probs


# --------------------------------------------------------------------------- #
# Pure-JAX reference (keeps the pre-BN biases and two-pass variance, so the
# allclose checks also validate the bias-cancellation / fused-BN rewrites).
# --------------------------------------------------------------------------- #
def _reference(x, p, compute_dtype):
    cd = compute_dtype

    def dot(a, w):
        return jnp.dot(a.astype(cd), w.astype(cd),
                       preferred_element_type=jnp.float32)

    def block(h, w, b, g, be):
        h = dot(h, w) + b
        mu = h.mean(0, keepdims=True)
        var = ((h - mu) ** 2).mean(0, keepdims=True)
        h = (h - mu) / jnp.sqrt(var + BN_EPS) * g + be
        return jnp.maximum(h, 0.0)

    h1 = block(x, p["w1"], p["b1"], p["g1"], p["be1"])
    z = block(h1, p["w2"], p["b2"], p["g2"], p["be2"])
    h3 = block(z, p["w3"], p["b3"], p["g3"], p["be3"])
    xo = dot(h3, p["wp"]) + p["bp"]
    aux = dot(z, p["wa"]) + p["ba"]
    probs = jax.nn.softmax(aux, axis=1)
    return xo, z, probs


if __name__ == "__main__":
    root = jax.random.PRNGKey(0)
    kp, kx1, kx2 = jax.random.split(root, 3)

    params = init_params(kp)
    prepared = prepare_params(params)          # one-time bf16 cast + packing

    # Tolerances: both kernel and reference feed bf16 to the MXU with f32
    # accumulation; remaining deltas come from bf16 rounding-order differences
    # in the fused BN scale/shift and cross-tile summation order.
    ATOL = RTOL = 1e-2

    # 1) Small batch -> single-invocation resident kernel.
    B1 = 8
    x1 = jax.random.normal(kx1, (B1, D_IN), jnp.float32)
    xo1, z1, pr1 = multi_task_autoencoder(x1, prepared)
    jax.block_until_ready((xo1, z1, pr1))
    r_xo1, r_z1, r_pr1 = _reference(x1, params, jnp.bfloat16)
    assert xo1.shape == (B1, D_IN) and z1.shape == (B1, D_Z) and pr1.shape == (B1, D_AUX)
    assert jnp.allclose(xo1, r_xo1, atol=ATOL, rtol=RTOL), "resident: recon mismatch"
    assert jnp.allclose(z1, r_z1, atol=ATOL, rtol=RTOL), "resident: z mismatch"
    assert jnp.allclose(pr1, r_pr1, atol=ATOL, rtol=RTOL), "resident: softmax mismatch"

    # 2) Larger batch forced through the gridded / pipelined 4-sweep path
    #    (cross-tile BN statistics accumulation).
    B2, TILE = 32, 16
    x2 = jax.random.normal(kx2, (B2, D_IN), jnp.float32)
    xo2, z2, pr2 = multi_task_autoencoder(x2, prepared,
                                          force_tiled=True, batch_tile=TILE)
    jax.block_until_ready((xo2, z2, pr2))
    r_xo2, r_z2, r_pr2 = _reference(x2, params, jnp.bfloat16)
    assert xo2.shape == (B2, D_IN) and z2.shape == (B2, D_Z) and pr2.shape == (B2, D_AUX)
    assert jnp.allclose(xo2, r_xo2, atol=ATOL, rtol=RTOL), "tiled: recon mismatch"
    assert jnp.allclose(z2, r_z2, atol=ATOL, rtol=RTOL), "tiled: z mismatch"
    assert jnp.allclose(pr2, r_pr2, atol=ATOL, rtol=RTOL), "tiled: softmax mismatch"

    print("KERNEL_OK")
</pallas_src>

<mosaic_0001>
module attributes {stable_mosaic.version = 11 : i64} {
  func.func @mtae_resident_kernel(%arg0: memref<8x88xbf16, #tpu.memory_space<vmem>>, %arg1: memref<88x70xbf16, #tpu.memory_space<vmem>>, %arg2: memref<70x54xbf16, #tpu.memory_space<vmem>>, %arg3: memref<54x72xbf16, #tpu.memory_space<vmem>>, %arg4: memref<70x88xbf16, #tpu.memory_space<vmem>>, %arg5: memref<8x128xf32, #tpu.memory_space<vmem>>, %arg6: memref<8x256xf32, #tpu.memory_space<vmem>>) attributes {dimension_semantics = [], scalar_prefetch = 0 : i64, scratch_operands = 0 : i64, tpu.core_type = #tpu.core_type<tc>} {
    %c0 = arith.constant 0 : index
    %c0_0 = arith.constant 0 : index
    %0 = vector.load %arg0[%c0, %c0_0] : memref<8x88xbf16, #tpu.memory_space<vmem>>, vector<8x88xbf16>
    %c0_1 = arith.constant 0 : index
    %c0_2 = arith.constant 0 : index
    %1 = vector.load %arg5[%c0_1, %c0_2] : memref<8x128xf32, #tpu.memory_space<vmem>>, vector<1x70xf32>
    %c1 = arith.constant 1 : index
    %c0_3 = arith.constant 0 : index
    %2 = vector.load %arg5[%c1, %c0_3] : memref<8x128xf32, #tpu.memory_space<vmem>>, vector<1x70xf32>
    %c2 = arith.constant 2 : index
    %c0_4 = arith.constant 0 : index
    %3 = vector.load %arg5[%c2, %c0_4] : memref<8x128xf32, #tpu.memory_space<vmem>>, vector<1x54xf32>
    %c3 = arith.constant 3 : index
    %c0_5 = arith.constant 0 : index
    %4 = vector.load %arg5[%c3, %c0_5] : memref<8x128xf32, #tpu.memory_space<vmem>>, vector<1x54xf32>
    %c4 = arith.constant 4 : index
    %c0_6 = arith.constant 0 : index
    %5 = vector.load %arg5[%c4, %c0_6] : memref<8x128xf32, #tpu.memory_space<vmem>>, vector<1x70xf32>
    %c5 = arith.constant 5 : index
    %c0_7 = arith.constant 0 : index
    %6 = vector.load %arg5[%c5, %c0_7] : memref<8x128xf32, #tpu.memory_space<vmem>>, vector<1x70xf32>
    %c6 = arith.constant 6 : index
    %c0_8 = arith.constant 0 : index
    %7 = vector.load %arg5[%c6, %c0_8] : memref<8x128xf32, #tpu.memory_space<vmem>>, vector<1x88xf32>
    %c7 = arith.constant 7 : index
    %c0_9 = arith.constant 0 : index
    %8 = vector.load %arg5[%c7, %c0_9] : memref<8x128xf32, #tpu.memory_space<vmem>>, vector<1x2xf32>
    %c0_10 = arith.constant 0 : index
    %c0_11 = arith.constant 0 : index
    %9 = vector.load %arg1[%c0_10, %c0_11] : memref<88x70xbf16, #tpu.memory_space<vmem>>, vector<88x70xbf16>
    %cst = arith.constant dense<0.000000e+00> : vector<8x70xf32>
    %10 = tpu.matmul %0, %9, %cst {dimension_numbers = #tpu.dot_dimension_numbers<[1], [0], [0], [1], [0, 0, 1, 1], [], []>} : vector<8x88xbf16>, vector<88x70xbf16>, vector<8x70xf32> -> vector<8x70xf32>
    %cst_12 = arith.constant dense<0.000000e+00> : vector<70xf32>
    %11 = vector.multi_reduction <add>, %10, %cst_12 [0] : vector<8x70xf32> to vector<70xf32>
    %12 = vector.shape_cast %11 : vector<70xf32> to vector<1x70xf32>
    %cst_13 = arith.constant 8.000000e+00 : f32
    %13 = vector.broadcast %cst_13 : f32 to vector<1x70xf32>
    %14 = arith.divf %12, %13 : vector<1x70xf32>
    %15 = arith.mulf %10, %10 : vector<8x70xf32>
    %cst_14 = arith.constant dense<0.000000e+00> : vector<70xf32>
    %16 = vector.multi_reduction <add>, %15, %cst_14 [0] : vector<8x70xf32> to vector<70xf32>
    %17 = vector.shape_cast %16 : vector<70xf32> to vector<1x70xf32>
    %cst_15 = arith.constant 8.000000e+00 : f32
    %18 = vector.broadcast %cst_15 : f32 to vector<1x70xf32>
    %19 = arith.divf %17, %18 : vector<1x70xf32>
    %20 = arith.mulf %14, %14 : vector<1x70xf32>
    %21 = arith.subf %19, %20 : vector<1x70xf32>
    %cst_16 = arith.constant 0.000000e+00 : f32
    %22 = vector.broadcast %cst_16 : f32 to vector<1x70xf32>
    %23 = arith.maximumf %21, %22 : vector<1x70xf32>
    %cst_17 = arith.constant 9.99999974E-6 : f32
    %24 = vector.broadcast %cst_17 : f32 to vector<1x70xf32>
    %25 = arith.addf %23, %24 : vector<1x70xf32>
    %26 = math.rsqrt %25 : vector<1x70xf32>
    %27 = arith.mulf %1, %26 : vector<1x70xf32>
    %28 = arith.mulf %14, %27 : vector<1x70xf32>
    %29 = arith.subf %2, %28 : vector<1x70xf32>
    %30 = vector.broadcast %27 : vector<1x70xf32> to vector<8x70xf32>
    %31 = arith.mulf %10, %30 : vector<8x70xf32>
    %32 = vector.broadcast %29 : vector<1x70xf32> to vector<8x70xf32>
    %33 = arith.addf %31, %32 : vector<8x70xf32>
    %cst_18 = arith.constant 0.000000e+00 : f32
    %34 = vector.broadcast %cst_18 : f32 to vector<8x70xf32>
    %35 = arith.maximumf %33, %34 : vector<8x70xf32>
    %36 = arith.truncf %35 : vector<8x70xf32> to vector<8x70xbf16>
    %c0_19 = arith.constant 0 : index
    %c0_20 = arith.constant 0 : index
    %37 = vector.load %arg2[%c0_19, %c0_20] : memref<70x54xbf16, #tpu.memory_space<vmem>>, vector<70x54xbf16>
    %cst_21 = arith.constant dense<0.000000e+00> : vector<8x54xf32>
    %38 = tpu.matmul %36, %37, %cst_21 {dimension_numbers = #tpu.dot_dimension_numbers<[1], [0], [0], [1], [0, 0, 1, 1], [], []>} : vector<8x70xbf16>, vector<70x54xbf16>, vector<8x54xf32> -> vector<8x54xf32>
    %cst_22 = arith.constant dense<0.000000e+00> : vector<54xf32>
    %39 = vector.multi_reduction <add>, %38, %cst_22 [0] : vector<8x54xf32> to vector<54xf32>
    %40 = vector.shape_cast %39 : vector<54xf32> to vector<1x54xf32>
    %cst_23 = arith.constant 8.000000e+00 : f32
    %41 = vector.broadcast %cst_23 : f32 to vector<1x54xf32>
    %42 = arith.divf %40, %41 : vector<1x54xf32>
    %43 = arith.mulf %38, %38 : vector<8x54xf32>
    %cst_24 = arith.constant dense<0.000000e+00> : vector<54xf32>
    %44 = vector.multi_reduction <add>, %43, %cst_24 [0] : vector<8x54xf32> to vector<54xf32>
    %45 = vector.shape_cast %44 : vector<54xf32> to vector<1x54xf32>
    %cst_25 = arith.constant 8.000000e+00 : f32
    %46 = vector.broadcast %cst_25 : f32 to vector<1x54xf32>
    %47 = arith.divf %45, %46 : vector<1x54xf32>
    %48 = arith.mulf %42, %42 : vector<1x54xf32>
    %49 = arith.subf %47, %48 : vector<1x54xf32>
    %cst_26 = arith.constant 0.000000e+00 : f32
    %50 = vector.broadcast %cst_26 : f32 to vector<1x54xf32>
    %51 = arith.maximumf %49, %50 : vector<1x54xf32>
    %cst_27 = arith.constant 9.99999974E-6 : f32
    %52 = vector.broadcast %cst_27 : f32 to vector<1x54xf32>
    %53 = arith.addf %51, %52 : vector<1x54xf32>
    %54 = math.rsqrt %53 : vector<1x54xf32>
    %55 = arith.mulf %3, %54 : vector<1x54xf32>
    %56 = arith.mulf %42, %55 : vector<1x54xf32>
    %57 = arith.subf %4, %56 : vector<1x54xf32>
    %58 = vector.broadcast %55 : vector<1x54xf32> to vector<8x54xf32>
    %59 = arith.mulf %38, %58 : vector<8x54xf32>
    %60 = vector.broadcast %57 : vector<1x54xf32> to vector<8x54xf32>
    %61 = arith.addf %59, %60 : vector<8x54xf32>
    %cst_28 = arith.constant 0.000000e+00 : f32
    %62 = vector.broadcast %cst_28 : f32 to vector<8x54xf32>
    %63 = arith.maximumf %61, %62 : vector<8x54xf32>
    %64 = arith.truncf %63 : vector<8x54xf32> to vector<8x54xbf16>
    %c0_29 = arith.constant 0 : index
    %c0_30 = arith.constant 0 : index
    %65 = vector.load %arg3[%c0_29, %c0_30] : memref<54x72xbf16, #tpu.memory_space<vmem>>, vector<54x72xbf16>
    %cst_31 = arith.constant dense<0.000000e+00> : vector<8x72xf32>
    %66 = tpu.matmul %64, %65, %cst_31 {dimension_numbers = #tpu.dot_dimension_numbers<[1], [0], [0], [1], [0, 0, 1, 1], [], []>} : vector<8x54xbf16>, vector<54x72xbf16>, vector<8x72xf32> -> vector<8x72xf32>
    %67 = vector.extract_strided_slice %66 {offsets = [0, 0], sizes = [8, 70], strides = [1, 1]} : vector<8x72xf32> to vector<8x70xf32>
    %cst_32 = arith.constant dense<0.000000e+00> : vector<70xf32>
    %68 = vector.multi_reduction <add>, %67, %cst_32 [0] : vector<8x70xf32> to vector<70xf32>
    %69 = vector.shape_cast %68 : vector<70xf32> to vector<1x70xf32>
    %cst_33 = arith.constant 8.000000e+00 : f32
    %70 = vector.broadcast %cst_33 : f32 to vector<1x70xf32>
    %71 = arith.divf %69, %70 : vector<1x70xf32>
    %72 = arith.mulf %67, %67 : vector<8x70xf32>
    %cst_34 = arith.constant dense<0.000000e+00> : vector<70xf32>
    %73 = vector.multi_reduction <add>, %72, %cst_34 [0] : vector<8x70xf32> to vector<70xf32>
    %74 = vector.shape_cast %73 : vector<70xf32> to vector<1x70xf32>
    %cst_35 = arith.constant 8.000000e+00 : f32
    %75 = vector.broadcast %cst_35 : f32 to vector<1x70xf32>
    %76 = arith.divf %74, %75 : vector<1x70xf32>
    %77 = arith.mulf %71, %71 : vector<1x70xf32>
    %78 = arith.subf %76, %77 : vector<1x70xf32>
    %cst_36 = arith.constant 0.000000e+00 : f32
    %79 = vector.broadcast %cst_36 : f32 to vector<1x70xf32>
    %80 = arith.maximumf %78, %79 : vector<1x70xf32>
    %cst_37 = arith.constant 9.99999974E-6 : f32
    %81 = vector.broadcast %cst_37 : f32 to vector<1x70xf32>
    %82 = arith.addf %80, %81 : vector<1x70xf32>
    %83 = math.rsqrt %82 : vector<1x70xf32>
    %84 = arith.mulf %5, %83 : vector<1x70xf32>
    %85 = arith.mulf %71, %84 : vector<1x70xf32>
    %86 = arith.subf %6, %85 : vector<1x70xf32>
    %87 = vector.broadcast %84 : vector<1x70xf32> to vector<8x70xf32>
    %88 = arith.mulf %67, %87 : vector<8x70xf32>
    %89 = vector.broadcast %86 : vector<1x70xf32> to vector<8x70xf32>
    %90 = arith.addf %88, %89 : vector<8x70xf32>
    %cst_38 = arith.constant 0.000000e+00 : f32
    %91 = vector.broadcast %cst_38 : f32 to vector<8x70xf32>
    %92 = arith.maximumf %90, %91 : vector<8x70xf32>
    %93 = arith.truncf %92 : vector<8x70xf32> to vector<8x70xbf16>
    %c0_39 = arith.constant 0 : index
    %c0_40 = arith.constant 0 : index
    %94 = vector.load %arg4[%c0_39, %c0_40] : memref<70x88xbf16, #tpu.memory_space<vmem>>, vector<70x88xbf16>
    %cst_41 = arith.constant dense<0.000000e+00> : vector<8x88xf32>
    %95 = tpu.matmul %93, %94, %cst_41 {dimension_numbers = #tpu.dot_dimension_numbers<[1], [0], [0], [1], [0, 0, 1, 1], [], []>} : vector<8x70xbf16>, vector<70x88xbf16>, vector<8x88xf32> -> vector<8x88xf32>
    %96 = vector.broadcast %7 : vector<1x88xf32> to vector<8x88xf32>
    %97 = arith.addf %95, %96 : vector<8x88xf32>
    %98 = vector.extract_strided_slice %66 {offsets = [0, 70], sizes = [8, 2], strides = [1, 1]} : vector<8x72xf32> to vector<8x2xf32>
    %99 = vector.broadcast %8 : vector<1x2xf32> to vector<8x2xf32>
    %100 = arith.addf %98, %99 : vector<8x2xf32>
    %cst_42 = arith.constant dense<0xFF800000> : vector<8xf32>
    %101 = vector.multi_reduction <maximumf>, %100, %cst_42 [1] : vector<8x2xf32> to vector<8xf32>
    %102 = vector.shape_cast %101 : vector<8xf32> to vector<8x1xf32>
    %103 = vector.broadcast %102 : vector<8x1xf32> to vector<8x2xf32>
    %104 = arith.subf %100, %103 : vector<8x2xf32>
    %105 = math.exp %104 : vector<8x2xf32>
    %cst_43 = arith.constant dense<0.000000e+00> : vector<8xf32>
    %106 = vector.multi_reduction <add>, %105, %cst_43 [1] : vector<8x2xf32> to vector<8xf32>
    %107 = vector.shape_cast %106 : vector<8xf32> to vector<8x1xf32>
    %108 = vector.broadcast %107 : vector<8x1xf32> to vector<8x2xf32>
    %109 = arith.divf %105, %108 : vector<8x2xf32>
    %c0_44 = arith.constant 0 : index
    %c0_45 = arith.constant 0 : index
    %110 = vector.load %arg6[%c0_44, %c0_45] : memref<8x256xf32, #tpu.memory_space<vmem>>, vector<8x88xf32>
    tpu.vector_store %arg6[%c0_44, %c0_45], %97 {strides = array<i32>} : memref<8x256xf32, #tpu.memory_space<vmem>>, vector<8x88xf32>,
    %c0_46 = arith.constant 0 : index
    %c88 = arith.constant 88 : index
    %111 = vector.load %arg6[%c0_46, %c88] : memref<8x256xf32, #tpu.memory_space<vmem>>, vector<8x2xf32>
    tpu.vector_store %arg6[%c0_46, %c88], %109 {strides = array<i32>} : memref<8x256xf32, #tpu.memory_space<vmem>>, vector<8x2xf32>,
    %c0_47 = arith.constant 0 : index
    %c128 = arith.constant 128 : index
    %112 = vector.load %arg6[%c0_47, %c128] : memref<8x256xf32, #tpu.memory_space<vmem>>, vector<8x54xf32>
    tpu.vector_store %arg6[%c0_47, %c128], %63 {strides = array<i32>} : memref<8x256xf32, #tpu.memory_space<vmem>>, vector<8x54xf32>,
    return
  }
}

</mosaic_0001>

<llo_original>
// kernel: tpu_custom_call.1
$region0: #{tpu_custom_call.1}
  #allocation0 [shape = 'u32[]', space=smem, size = 0x4, offset = 0x4, fixed_abs, tag = 'smem constant byte address 0x4 - core index']
  #allocation1 [shape = 'u32[144,128]{1,0:T(1,128)}', space=vmem, size = 0x12000, scoped, tag = 'internal scratch']
  %s0 = inlined_call_operand.vmem [shape: bf16[8,88], index: 0, kind: input, shape index: {}]
  %s1 = inlined_call_operand.vmem [shape: bf16[88,70], index: 1, kind: input, shape index: {}]
  %s2 = inlined_call_operand.vmem [shape: bf16[70,54], index: 2, kind: input, shape index: {}]
  %s3 = inlined_call_operand.vmem [shape: bf16[54,72], index: 3, kind: input, shape index: {}]
  %s4 = inlined_call_operand.vmem [shape: bf16[70,88], index: 4, kind: input, shape index: {}]
  %s5 = inlined_call_operand.vmem [shape: f32[8,128], index: 5, kind: input, shape index: {}]
  %s6 = inlined_call_operand.hbm [shape: f32[8,256], index: 6, kind: output, shape index: {}]
  %s7 = sld [smem:[#allocation0]]
  $region34: #{tpu_custom_call.1} parent=0
    _
  %s9 = ssub.s32 1, %s7
  %s10 = scalar_select 0, %s9, %s7
  $region1: #{tpu_custom_call.1} parent=0
    #allocation2 [shape = 'u8[8192]{0}', space=vmem, size = 0x2000, scoped, tag = 'output window, operand 0, single buffered']
    #allocation3 [shape = 's32[1]{0}', space=sflag, size = 0x4, scoped, tag = 'scoped memory for tpu_custom_call.1']
    %11 = vsyncpa [#allocation3], 0
    // Predicated region
    $region2: #{tpu_custom_call.1} parent=1 // pred_check
      _
    $region3: #{tpu_custom_call.1} parent=1 // pred_check_branch
      %13 = sbr.rel (0) target = $region5
    $region4: #{tpu_custom_call.1} parent=1 // pred_region
      _
    $region5: #{tpu_custom_call.1} parent=1 // pred_fallthru
      _
    // Predicated region
    $region6: #{tpu_custom_call.1} parent=1 // pred_check
      _
    $region7: #{tpu_custom_call.1} parent=1 // pred_check_branch
      %15 = sbr.rel (0) target = $region9
    $region8: #{tpu_custom_call.1} parent=1 // pred_region
      _
    $region9: #{tpu_custom_call.1} parent=1 // pred_fallthru
      _
    // Predicated region
    $region10: #{tpu_custom_call.1} parent=1 // pred_check
      _
    $region11: #{tpu_custom_call.1} parent=1 // pred_check_branch
      %17 = sbr.rel (0) target = $region13
    $region12: #{tpu_custom_call.1} parent=1 // pred_region
      _
    $region13: #{tpu_custom_call.1} parent=1 // pred_fallthru
      _
    // Predicated region
    $region14: #{tpu_custom_call.1} parent=1 // pred_check
      _
    $region15: #{tpu_custom_call.1} parent=1 // pred_check_branch
      %19 = sbr.rel (0) target = $region17
    $region16: #{tpu_custom_call.1} parent=1 // pred_region
      _
    $region17: #{tpu_custom_call.1} parent=1 // pred_fallthru
      _
    // Predicated region
    $region18: #{tpu_custom_call.1} parent=1 // pred_check
      _
    $region19: #{tpu_custom_call.1} parent=1 // pred_check_branch
      %21 = sbr.rel (0) target = $region21
    $region20: #{tpu_custom_call.1} parent=1 // pred_region
      _
    $region21: #{tpu_custom_call.1} parent=1 // pred_fallthru
      _
    // Predicated region
    $region22: #{tpu_custom_call.1} parent=1 // pred_check
      _
    $region23: #{tpu_custom_call.1} parent=1 // pred_check_branch
      %23 = sbr.rel (0) target = $region25
    $region24: #{tpu_custom_call.1} parent=1 // pred_region
      _
    $region25: #{tpu_custom_call.1} parent=1 // pred_fallthru
      _
    %v25 = vld [vmem:[%s0] sm:$0xf]
    %v26 = vld [vmem:[%s5] sm:$0x1]
    %v27 = vld [vmem:[%s5 + $0x1] sm:$0x1]
    %v28 = vld [vmem:[%s5 + $0x2] sm:$0x1]
    %v29 = vld [vmem:[%s5 + $0x3] sm:$0x1]
    %v30 = vld [vmem:[%s5 + $0x4] sm:$0x1]
    %v31 = vld [vmem:[%s5 + $0x5] sm:$0x1]
    %v32 = vld [vmem:[%s5 + $0x6] sm:$0x1]
    %v33 = vld [vmem:[%s5 + $0x7] sm:$0x1]
    %v34 = vld [vmem:[%s1] sm:$0xf]
    %v35 = vld [vmem:[%s1 + $0x4] sm:$0xf]
    %v36 = vld [vmem:[%s1 + $0x8] sm:$0xf]
    %v37 = vld [vmem:[%s1 + $0xc] sm:$0xf]
    %v38 = vld [vmem:[%s1 + $0x10] sm:$0xf]
    %v39 = vld [vmem:[%s1 + $0x14] sm:$0xf]
    %v40 = vld [vmem:[%s1 + $0x18] sm:$0xf]
    %v41 = vld [vmem:[%s1 + $0x1c] sm:$0xf]
    %v42 = vld [vmem:[%s1 + $0x20] sm:$0xf]
    %v43 = vld [vmem:[%s1 + $0x24] sm:$0xf]
    %v44 = vld [vmem:[%s1 + $0x28] sm:$0xf]
    %v56 = vunpack.c.l.b16 %v34
    %v57 = vunpack.c.l.b16 %v35
    %v58 = vunpack.c.l.b16 %v36
    %v59 = vunpack.c.l.b16 %v37
    %v60 = vunpack.c.l.b16 %v38
    %v61 = vunpack.c.l.b16 %v39
    %v62 = vunpack.c.l.b16 %v40
    %v63 = vunpack.c.l.b16 %v41
    %v64 = vunpack.c.l.b16 %v42
    %v65 = vunpack.c.l.b16 %v43
    %v66 = vunpack.c.l.b16 %v44
    %v67 = vpack.c.b16 %v57, %v56
    %v68 = vpack.c.b16 %v59, %v58
    %v69 = vpack.c.b16 %v61, %v60
    %v70 = vpack.c.b16 %v63, %v62
    %v71 = vpack.c.b16 %v65, %v64
    %v72 = vpack.c.b16 %v66, %v66
    %vm78 = vcmask 719872
    %v80 = vsel %vm78, %v25, 0
    %vm82 = vcmask 1043456
    %v84 = vsel %vm82, %v72, 0
    %86 = vmatprep.subr.bf16.mxu0 0
    %87 = vmatpush1.bf16.msra.mxu0 %v67
    %88 = vmatprep.subr.bf16.mxu0 0
    %89 = vmatpush1.bf16.msra.mxu0 %v68
    %90 = vmatprep.subr.bf16.mxu0 0
    %91 = vmatpush1.bf16.msra.mxu0 %v69
    %92 = vmatprep.subr.bf16.mxu0 0
    %93 = vmatpush1.bf16.msra.mxu0 %v70
    %94 = vmatprep.subr.bf16.mxu0 0
    %95 = vmatpush1.bf16.msra.mxu0 %v71
    %96 = vmatprep.subr.bf16.mxu0 0
    %97 = vmatpush1.bf16.msra.mxu0 %v84
    %98 = vmatprep.subr.bf16.mxu0 0
    %99 = vmatpush1.bf16.msra.mxu0 0
    %100 = vmatprep.subr.bf16.mxu0 0
    %101 = vmatpush1.bf16.msra.mxu0 0
    %102 = vmatprep.subr.bf16.mxu0 0
    %103 = vmatpush1.bf16.msra.mxu0 0
    %104 = vmatprep.subr.bf16.mxu0 0
    %105 = vmatpush1.bf16.msra.mxu0 0
    %106 = vmatprep.subr.bf16.mxu0 0
    %107 = vmatpush1.bf16.msra.mxu0 0
    %108 = vmatprep.subr.bf16.mxu0 0
    %109 = vmatpush1.bf16.msra.mxu0 0
    %110 = vmatprep.subr.bf16.mxu0 0
    %111 = vmatpush1.bf16.msra.mxu0 0
    %112 = vmatprep.subr.bf16.mxu0 0
    %113 = vmatpush1.bf16.msra.mxu0 0
    %114 = vmatprep.subr.bf16.mxu0 0
    %115 = vmatpush1.bf16.msra.mxu0 0
    %116 = vmatprep.subr.bf16.mxu0 0
    %117 = vmatpush1.bf16.msra.mxu0 0
    %118 = vmatprep.mubr.bf16.mxu0 0
    %119 = vmatmul.mubr.bf16.gmra.mrb[0].mxu0 %v80
    %v120 = vpop.f32.mrb[0].mxu0
    %v121 = vadd.f32 0.0, %v120
    %v122 = vpop.f32.mrb[0].mxu0
    %v123 = vpop.f32.mrb[0].mxu0
    %v124 = vpop.f32.mrb[0].mxu0
    %125 = vdwg.mxu0
    %vm126 = vcmask 572416
    %v127 = vsel %vm126, %v121, 0.0
    %v128 = vrot.slane %v127, 4
    %v129 = vadd.f32 %v127, %v128
    %v130 = vrot.slane %v129, 2
    %v131 = vadd.f32 %v129, %v130
    %v132 = vrot.slane %v131, 1
    %v133 = vadd.f32 %v131, %v132
    %v134 = vrcp.pop 8.0
    %v135 = vmul.f32 %v133, %v134
    %v136 = vmul.f32 %v121, %v121
    %v137 = vsel %vm126, %v136, 0.0
    %v138 = vrot.slane %v137, 4
    %v139 = vadd.f32 %v137, %v138
    %v140 = vrot.slane %v139, 2
    %v141 = vadd.f32 %v139, %v140
    %v142 = vrot.slane %v141, 1
    %v143 = vadd.f32 %v141, %v142
    %v144 = vmul.f32 %v143, %v134
    %v145 = vmul.f32 %v135, %v135
    %v146 = vsub.f32 %v144, %v145
    %v147 = vmax.f32 %v146, 0.0
    %v148 = vadd.f32 %v147, 1e-05
    %v149 = vrsqrt.pop %v148
    %v150 = vmul.f32 %v26, %v149
    %v151 = vmul.f32 %v135, %v150
    %v152 = vsub.f32 %v27, %v151
    %v153 = vlaneseq
    %v154 = vshrl.u32 %v153, 7
    %v155 = vsub.s32 0, %v154
    %v156 = vrot.slane %v150, %v155
    %v157 = vmul.f32 %v121, %v156
    %v158 = vlaneseq
    %v159 = vshrl.u32 %v158, 7
    %v160 = vsub.s32 0, %v159
    %v161 = vrot.slane %v152, %v160
    %v162 = vadd.f32 %v157, %v161
    %v163 = vmax.f32 %v162, 0.0
    %v164 = vpack.c.bf16 %v163, %v163
    %v165 = vld [vmem:[%s2] sm:$0xf]
    %v166 = vld [vmem:[%s2 + $0x4] sm:$0xf]
    %v167 = vld [vmem:[%s2 + $0x8] sm:$0xf]
    %v168 = vld [vmem:[%s2 + $0xc] sm:$0xf]
    %v169 = vld [vmem:[%s2 + $0x10] sm:$0xf]
    %v170 = vld [vmem:[%s2 + $0x14] sm:$0xf]
    %v171 = vld [vmem:[%s2 + $0x18] sm:$0xf]
    %v172 = vld [vmem:[%s2 + $0x1c] sm:$0xf]
    %v173 = vld [vmem:[%s2 + $0x20] sm:$0x7]
    %v183 = vunpack.c.l.b16 %v165
    %v184 = vunpack.c.l.b16 %v166
    %v185 = vunpack.c.l.b16 %v167
    %v186 = vunpack.c.l.b16 %v168
    %v187 = vunpack.c.l.b16 %v169
    %v188 = vunpack.c.l.b16 %v170
    %v189 = vunpack.c.l.b16 %v171
    %v190 = vunpack.c.l.b16 %v172
    %v191 = vunpack.c.l.b16 %v173
    %v192 = vpack.c.b16 %v184, %v183
    %v193 = vpack.c.b16 %v186, %v185
    %v194 = vpack.c.b16 %v188, %v187
    %v195 = vpack.c.b16 %v190, %v189
    %v196 = vpack.c.b16 %v191, %v191
    %v202 = vsel %vm126, %v164, 0
    %vm204 = vcmask 1042432
    %v206 = vsel %vm204, %v196, 0
    %208 = vmatprep.subr.bf16.mxu0 0
    %209 = vmatpush1.bf16.msra.mxu0 %v192
    %210 = vmatprep.subr.bf16.mxu0 0
    %211 = vmatpush1.bf16.msra.mxu0 %v193
    %212 = vmatprep.subr.bf16.mxu0 0
    %213 = vmatpush1.bf16.msra.mxu0 %v194
    %214 = vmatprep.subr.bf16.mxu0 0
    %215 = vmatpush1.bf16.msra.mxu0 %v195
    %216 = vmatprep.subr.bf16.mxu0 0
    %217 = vmatpush1.bf16.msra.mxu0 %v206
    %218 = vmatprep.subr.bf16.mxu0 0
    %219 = vmatpush1.bf16.msra.mxu0 0
    %220 = vmatprep.subr.bf16.mxu0 0
    %221 = vmatpush1.bf16.msra.mxu0 0
    %222 = vmatprep.subr.bf16.mxu0 0
    %223 = vmatpush1.bf16.msra.mxu0 0
    %224 = vmatprep.subr.bf16.mxu0 0
    %225 = vmatpush1.bf16.msra.mxu0 0
    %226 = vmatprep.subr.bf16.mxu0 0
    %227 = vmatpush1.bf16.msra.mxu0 0
    %228 = vmatprep.subr.bf16.mxu0 0
    %229 = vmatpush1.bf16.msra.mxu0 0
    %230 = vmatprep.subr.bf16.mxu0 0
    %231 = vmatpush1.bf16.msra.mxu0 0
    %232 = vmatprep.subr.bf16.mxu0 0
    %233 = vmatpush1.bf16.msra.mxu0 0
    %234 = vmatprep.subr.bf16.mxu0 0
    %235 = vmatpush1.bf16.msra.mxu0 0
    %236 = vmatprep.subr.bf16.mxu0 0
    %237 = vmatpush1.bf16.msra.mxu0 0
    %238 = vmatprep.subr.bf16.mxu0 0
    %239 = vmatpush1.bf16.msra.mxu0 0
    %240 = vmatprep.mubr.bf16.mxu0 0
    %241 = vmatmul.mubr.bf16.gmra.mrb[0].mxu0 %v202
    %v242 = vpop.f32.mrb[0].mxu0
    %v243 = vadd.f32 0.0, %v242
    %v244 = vpop.f32.mrb[0].mxu0
    %v245 = vpop.f32.mrb[0].mxu0
    %v246 = vpop.f32.mrb[0].mxu0
    %247 = vdwg.mxu0
    %vm248 = vcmask 441344
    %v249 = vsel %vm248, %v243, 0.0
    %v250 = vrot.slane %v249, 4
    %v251 = vadd.f32 %v249, %v250
    %v252 = vrot.slane %v251, 2
    %v253 = vadd.f32 %v251, %v252
    %v254 = vrot.slane %v253, 1
    %v255 = vadd.f32 %v253, %v254
    %v256 = vmul.f32 %v255, %v134
    %v257 = vmul.f32 %v243, %v243
    %v258 = vsel %vm248, %v257, 0.0
    %v259 = vrot.slane %v258, 4
    %v260 = vadd.f32 %v258, %v259
    %v261 = vrot.slane %v260, 2
    %v262 = vadd.f32 %v260, %v261
    %v263 = vrot.slane %v262, 1
    %v264 = vadd.f32 %v262, %v263
    %v265 = vmul.f32 %v264, %v134
    %v266 = vmul.f32 %v256, %v256
    %v267 = vsub.f32 %v265, %v266
    %v268 = vmax.f32 %v267, 0.0
    %v269 = vadd.f32 %v268, 1e-05
    %v270 = vrsqrt.pop %v269
    %v271 = vmul.f32 %v28, %v270
    %v272 = vmul.f32 %v256, %v271
    %v273 = vsub.f32 %v29, %v272
    %v274 = vlaneseq
    %v275 = vshrl.u32 %v274, 7
    %v276 = vsub.s32 0, %v275
    %v277 = vrot.slane %v271, %v276
    %v278 = vmul.f32 %v243, %v277
    %v279 = vlaneseq
    %v280 = vshrl.u32 %v279, 7
    %v281 = vsub.s32 0, %v280
    %v282 = vrot.slane %v273, %v281
    %v283 = vadd.f32 %v278, %v282
    %v284 = vmax.f32 %v283, 0.0
    %v285 = vpack.c.bf16 %v284, %v284
    %v286 = vld [vmem:[%s3] sm:$0xf]
    %v287 = vld [vmem:[%s3 + $0x4] sm:$0xf]
    %v288 = vld [vmem:[%s3 + $0x8] sm:$0xf]
    %v289 = vld [vmem:[%s3 + $0xc] sm:$0xf]
    %v290 = vld [vmem:[%s3 + $0x10] sm:$0xf]
    %v291 = vld [vmem:[%s3 + $0x14] sm:$0xf]
    %v292 = vld [vmem:[%s3 + $0x18] sm:$0x7]
    %v300 = vunpack.c.l.b16 %v286
    %v301 = vunpack.c.l.b16 %v287
    %v302 = vunpack.c.l.b16 %v288
    %v303 = vunpack.c.l.b16 %v289
    %v304 = vunpack.c.l.b16 %v290
    %v305 = vunpack.c.l.b16 %v291
    %v306 = vunpack.c.l.b16 %v292
    %v307 = vpack.c.b16 %v301, %v300
    %v308 = vpack.c.b16 %v303, %v302
    %v309 = vpack.c.b16 %v305, %v304
    %v310 = vpack.c.b16 %v306, %v306
    %v315 = vsel %vm248, %v285, 0
    %v318 = vsel %vm204, %v310, 0
    %320 = vmatprep.subr.bf16.mxu0 0
    %321 = vmatpush1.bf16.msra.mxu0 %v307
    %322 = vmatprep.subr.bf16.mxu0 0
    %323 = vmatpush1.bf16.msra.mxu0 %v308
    %324 = vmatprep.subr.bf16.mxu0 0
    %325 = vmatpush1.bf16.msra.mxu0 %v309
    %326 = vmatprep.subr.bf16.mxu0 0
    %327 = vmatpush1.bf16.msra.mxu0 %v318
    %328 = vmatprep.subr.bf16.mxu0 0
    %329 = vmatpush1.bf16.msra.mxu0 0
    %330 = vmatprep.subr.bf16.mxu0 0
    %331 = vmatpush1.bf16.msra.mxu0 0
    %332 = vmatprep.subr.bf16.mxu0 0
    %333 = vmatpush1.bf16.msra.mxu0 0
    %334 = vmatprep.subr.bf16.mxu0 0
    %335 = vmatpush1.bf16.msra.mxu0 0
    %336 = vmatprep.subr.bf16.mxu0 0
    %337 = vmatpush1.bf16.msra.mxu0 0
    %338 = vmatprep.subr.bf16.mxu0 0
    %339 = vmatpush1.bf16.msra.mxu0 0
    %340 = vmatprep.subr.bf16.mxu0 0
    %341 = vmatpush1.bf16.msra.mxu0 0
    %342 = vmatprep.subr.bf16.mxu0 0
    %343 = vmatpush1.bf16.msra.mxu0 0
    %344 = vmatprep.subr.bf16.mxu0 0
    %345 = vmatpush1.bf16.msra.mxu0 0
    %346 = vmatprep.subr.bf16.mxu0 0
    %347 = vmatpush1.bf16.msra.mxu0 0
    %348 = vmatprep.subr.bf16.mxu0 0
    %349 = vmatpush1.bf16.msra.mxu0 0
    %350 = vmatprep.subr.bf16.mxu0 0
    %351 = vmatpush1.bf16.msra.mxu0 0
    %352 = vmatprep.mubr.bf16.mxu0 0
    %353 = vmatmul.mubr.bf16.gmra.mrb[0].mxu0 %v315
    %v354 = vpop.f32.mrb[0].mxu0
    %v355 = vadd.f32 0.0, %v354
    %v356 = vpop.f32.mrb[0].mxu0
    %v357 = vpop.f32.mrb[0].mxu0
    %v358 = vpop.f32.mrb[0].mxu0
    %359 = vdwg.mxu0
    %v360 = vsel %vm126, %v355, 0.0
    %v361 = vrot.slane %v360, 4
    %v362 = vadd.f32 %v360, %v361
    %v363 = vrot.slane %v362, 2
    %v364 = vadd.f32 %v362, %v363
    %v365 = vrot.slane %v364, 1
    %v366 = vadd.f32 %v364, %v365
    %v367 = vmul.f32 %v366, %v134
    %v368 = vmul.f32 %v355, %v355
    %v369 = vsel %vm126, %v368, 0.0
    %v370 = vrot.slane %v369, 4
    %v371 = vadd.f32 %v369, %v370
    %v372 = vrot.slane %v371, 2
    %v373 = vadd.f32 %v371, %v372
    %v374 = vrot.slane %v373, 1
    %v375 = vadd.f32 %v373, %v374
    %v376 = vmul.f32 %v375, %v134
    %v377 = vmul.f32 %v367, %v367
    %v378 = vsub.f32 %v376, %v377
    %v379 = vmax.f32 %v378, 0.0
    %v380 = vadd.f32 %v379, 1e-05
    %v381 = vrsqrt.pop %v380
    %v382 = vmul.f32 %v30, %v381
    %v383 = vmul.f32 %v367, %v382
    %v384 = vsub.f32 %v31, %v383
    %v385 = vlaneseq
    %v386 = vshrl.u32 %v385, 7
    %v387 = vsub.s32 0, %v386
    %v388 = vrot.slane %v382, %v387
    %v389 = vmul.f32 %v355, %v388
    %v390 = vlaneseq
    %v391 = vshrl.u32 %v390, 7
    %v392 = vsub.s32 0, %v391
    %v393 = vrot.slane %v384, %v392
    %v394 = vadd.f32 %v389, %v393
    %v395 = vmax.f32 %v394, 0.0
    %v396 = vpack.c.bf16 %v395, %v395
    %v397 = vld [vmem:[%s4] sm:$0xf]
    %v398 = vld [vmem:[%s4 + $0x4] sm:$0xf]
    %v399 = vld [vmem:[%s4 + $0x8] sm:$0xf]
    %v400 = vld [vmem:[%s4 + $0xc] sm:$0xf]
    %v401 = vld [vmem:[%s4 + $0x10] sm:$0xf]
    %v402 = vld [vmem:[%s4 + $0x14] sm:$0xf]
    %v403 = vld [vmem:[%s4 + $0x18] sm:$0xf]
    %v404 = vld [vmem:[%s4 + $0x1c] sm:$0xf]
    %v405 = vld [vmem:[%s4 + $0x20] sm:$0x7]
    %v406 = vlaneseq
    %v407 = vshrl.u32 %v406, 7
    %v408 = vsub.s32 0, %v407
    %v409 = vrot.slane %v32, %v408
    %v419 = vunpack.c.l.b16 %v397
    %v420 = vunpack.c.l.b16 %v398
    %v421 = vunpack.c.l.b16 %v399
    %v422 = vunpack.c.l.b16 %v400
    %v423 = vunpack.c.l.b16 %v401
    %v424 = vunpack.c.l.b16 %v402
    %v425 = vunpack.c.l.b16 %v403
    %v426 = vunpack.c.l.b16 %v404
    %v427 = vunpack.c.l.b16 %v405
    %v428 = vpack.c.b16 %v420, %v419
    %v429 = vpack.c.b16 %v422, %v421
    %v430 = vpack.c.b16 %v424, %v423
    %v431 = vpack.c.b16 %v426, %v425
    %v432 = vpack.c.b16 %v427, %v427
    %v438 = vsel %vm126, %v396, 0
    %v441 = vsel %vm204, %v432, 0
    %443 = vmatprep.subr.bf16.mxu0 0
    %444 = vmatpush1.bf16.msra.mxu0 %v428
    %445 = vmatprep.subr.bf16.mxu0 0
    %446 = vmatpush1.bf16.msra.mxu0 %v429
    %447 = vmatprep.subr.bf16.mxu0 0
    %448 = vmatpush1.bf16.msra.mxu0 %v430
    %449 = vmatprep.subr.bf16.mxu0 0
    %450 = vmatpush1.bf16.msra.mxu0 %v431
    %451 = vmatprep.subr.bf16.mxu0 0
    %452 = vmatpush1.bf16.msra.mxu0 %v441
    %453 = vmatprep.subr.bf16.mxu0 0
    %454 = vmatpush1.bf16.msra.mxu0 0
    %455 = vmatprep.subr.bf16.mxu0 0
    %456 = vmatpush1.bf16.msra.mxu0 0
    %457 = vmatprep.subr.bf16.mxu0 0
    %458 = vmatpush1.bf16.msra.mxu0 0
    %459 = vmatprep.subr.bf16.mxu0 0
    %460 = vmatpush1.bf16.msra.mxu0 0
    %461 = vmatprep.subr.bf16.mxu0 0
    %462 = vmatpush1.bf16.msra.mxu0 0
    %463 = vmatprep.subr.bf16.mxu0 0
    %464 = vmatpush1.bf16.msra.mxu0 0
    %465 = vmatprep.subr.bf16.mxu0 0
    %466 = vmatpush1.bf16.msra.mxu0 0
    %467 = vmatprep.subr.bf16.mxu0 0
    %468 = vmatpush1.bf16.msra.mxu0 0
    %469 = vmatprep.subr.bf16.mxu0 0
    %470 = vmatpush1.bf16.msra.mxu0 0
    %471 = vmatprep.subr.bf16.mxu0 0
    %472 = vmatpush1.bf16.msra.mxu0 0
    %473 = vmatprep.subr.bf16.mxu0 0
    %474 = vmatpush1.bf16.msra.mxu0 0
    %475 = vmatprep.mubr.bf16.mxu0 0
    %476 = vmatmul.mubr.bf16.gmra.mrb[0].mxu0 %v438
    %v477 = vpop.f32.mrb[0].mxu0
    %v478 = vadd.f32 %v409, %v477
    %v479 = vpop.f32.mrb[0].mxu0
    %v480 = vpop.f32.mrb[0].mxu0
    %v481 = vpop.f32.mrb[0].mxu0
    %482 = vdwg.mxu0
    %v483 = vlaneseq
    %v484 = vshrl.u32 %v483, 7
    %v485 = vsub.s32 0, %v484
    %v486 = vrot.slane %v33, %v485
    %488 = vrot.lane.b32.xlu0 %v486, 70
    %v489 = vpop.permute.xlu0 %488
    %v491 = vadd.f32 %v355, %v489
    %vm492 = vcmask 589360
    %v493 = vsel %vm492, %v491, -inf
    %494 = vmax.xlane.f32.xlu0 %v493
    %v495 = vpop.xlane.xlu0 %494
    %v496 = vsub.f32 %v491, %v495
    %v497 = vmul.f32 %v496, 1.442695
    %v498 = vpow.pop %v497
    %500 = vrot.lane.b32.xlu0 %v498, 58
    %v501 = vpop.permute.xlu0 %500
    %vm503 = vcmask 15360
    %v504 = vsel %vm503, %v501, 0.0
    %505 = vadd.xlane.f32.xlu0 %v504
    %v506 = vpop.xlane.xlu0 %505
    %v507 = vrcp.pop %v506
    %v508 = vmul.f32 %v498, %v507
    %509 = vst.msk [vmem:[#allocation2] sm:$0xff] %vm78, %v478
    %511 = vrot.lane.b32.xlu0 %v508, 18
    %v512 = vpop.permute.xlu0 %511
    %vm514 = vcmask 736960
    %515 = vst.msk [vmem:[#allocation2] sm:$0xff] %vm514, %v512
    %516 = vst.msk [vmem:[#allocation2 + $0x8] sm:$0xff] %vm248, %v284
    // Predicated region
    $region26: #{tpu_custom_call.1} parent=1 // pred_check
      _
    $region27: #{tpu_custom_call.1} parent=1 // pred_check_branch
      %518 = sbr.rel (0) target = $region29
    $region28: #{tpu_custom_call.1} parent=1 // pred_region
      %s520 = ssub.s32 256, 256
      %521 = vsyncadd [#allocation3], %s520
      %s523 = sshll.u32 [#allocation2], 4
      %s524 = int_to_ptr.vmem [resolvable:$true] %s523
      %526 = dma.vmem_to_hbm [thread:$0]  %s524, 256, %s6, [#allocation3]
    $region29: #{tpu_custom_call.1} parent=1 // pred_fallthru
      _
    // Predicated region
    $region30: #{tpu_custom_call.1} parent=1 // pred_check
      _
    $region31: #{tpu_custom_call.1} parent=1 // pred_check_branch
      %528 = sbr.rel (0) target = $region33
    $region32: #{tpu_custom_call.1} parent=1 // pred_region
      %529 = dma.done [#allocation3], 256
    $region33: #{tpu_custom_call.1} parent=1 // pred_fallthru
      _
    %530 = vsyncpa [#allocation3], 1

</llo_original>
